<compile_context>
chip_gen: v5e
topology: v5e:2x2
jax: 0.10.0
libtpu: 0.0.40
codegen_flags: <defaults>
</compile_context>

<pallas_src>
import jax
import jax.numpy as jnp
from jax.experimental import pallas as pl
from jax.experimental.pallas import tpu as pltpu


# ----------------------------------------------------------------------------
# Kernels
# ----------------------------------------------------------------------------
def _normalize_kernel(c_ref, m_ref):
    # Row-wise L2 normalization: M = c * rsqrt(sum(c*c, axis=-1)).
    c = c_ref[...]
    inv = jax.lax.rsqrt(jnp.sum(c * c, axis=-1, keepdims=True))
    m_ref[...] = c * inv


def _mul_kernel(x_ref, m_ref, o_ref):
    # Hot path: pure elementwise multiply (mem-bound).
    o_ref[...] = x_ref[...] * m_ref[...]


# ----------------------------------------------------------------------------
# Tiling helpers
# ----------------------------------------------------------------------------
def _round_up(v, m):
    return ((v + m - 1) // m) * m


def _pad2d(a, n_pad, d_pad):
    n, d = a.shape
    if n == n_pad and d == d_pad:
        return a
    return jnp.pad(a, ((0, n_pad - n), (0, d_pad - d)))


def _choose_tile_rows(n_rows8, d_pad, n_arrays, itemsize=4):
    """Pick a row-tile: ~4 MiB per input block, VMEM-safe, >=2 grid steps."""
    # Target ~4 MiB per block (measured >=85% of HBM roofline at 2+ MiB tiles).
    target = (4 * 1024 * 1024) // (itemsize * d_pad)
    # Cap: n_arrays x 2 pipeline buffers must fit well under ~40 MiB
    # (leaves headroom on v7x's 64 MiB physical VMEM).
    cap = (40 * 1024 * 1024) // (n_arrays * 2 * itemsize * d_pad)
    tile = max(8, (min(target, cap) // 8) * 8)
    tile = min(tile, n_rows8)
    # Keep at least 2 grid iterations when possible (v7x has 2 TensorCores).
    if n_rows8 >= 16 and tile > n_rows8 // 2:
        tile = max(8, ((n_rows8 // 2) // 8) * 8)
    return tile


# ----------------------------------------------------------------------------
# Wrappers
# ----------------------------------------------------------------------------
def pedcc_normalize_centers(centers):
    """Mirrors pedccModel.__init__: M = centers / ||centers||_2 (dim=1, keepdim)."""
    centers = centers.astype(jnp.float32)
    n, d = centers.shape
    d_pad = _round_up(d, 128)
    tile = _choose_tile_rows(_round_up(n, 8), d_pad, n_arrays=2)
    n_pad = _round_up(n, tile)

    cp = _pad2d(centers, n_pad, d_pad)
    spec = pl.BlockSpec((tile, d_pad), lambda i: (i, 0))
    vmem_bytes = 2 * 2 * tile * d_pad * 4 + (8 << 20)

    m_pad = pl.pallas_call(
        _normalize_kernel,
        out_shape=jax.ShapeDtypeStruct((n_pad, d_pad), jnp.float32),
        grid=(n_pad // tile,),
        in_specs=[spec],
        out_specs=spec,
        compiler_params=pltpu.CompilerParams(
            dimension_semantics=("parallel",),
            vmem_limit_bytes=vmem_bytes,
        ),
    )(cp)
    return m_pad[:n, :d]


def pedcc_forward(x, m):
    """Mirrors pedccModel.forward: out = x * M (elementwise)."""
    assert x.shape == m.shape, "x and M must have the same shape"
    x = x.astype(jnp.float32)
    m = m.astype(jnp.float32)
    n, d = x.shape

    d_pad = _round_up(d, 128)
    tile = _choose_tile_rows(_round_up(n, 8), d_pad, n_arrays=3)
    n_pad = _round_up(n, tile)

    xp = _pad2d(x, n_pad, d_pad)
    mp = _pad2d(m, n_pad, d_pad)

    spec = pl.BlockSpec((tile, d_pad), lambda i: (i, 0))
    vmem_bytes = 3 * 2 * tile * d_pad * 4 + (8 << 20)

    out_pad = pl.pallas_call(
        _mul_kernel,
        out_shape=jax.ShapeDtypeStruct((n_pad, d_pad), jnp.float32),
        grid=(n_pad // tile,),
        in_specs=[spec, spec],
        out_specs=spec,
        compiler_params=pltpu.CompilerParams(
            dimension_semantics=("parallel",),
            vmem_limit_bytes=vmem_bytes,
        ),
    )(xp, mp)
    return out_pad[:n, :d]


def pedcc_model_apply(x, centers):
    """Full module semantics: normalize centers once, then multiply."""
    m = pedcc_normalize_centers(centers)
    return pedcc_forward(x, m)


def pedcc_reference(x, centers):
    norm = jnp.linalg.norm(centers.astype(jnp.float32), axis=1, keepdims=True)
    return x.astype(jnp.float32) * (centers.astype(jnp.float32) / norm)


# ----------------------------------------------------------------------------
# Self-test
# ----------------------------------------------------------------------------
if __name__ == "__main__":
    key = jax.random.PRNGKey(0)
    k1, k2, k3, k4 = jax.random.split(key, 4)

    # Small, module-consistent shapes: (num_centers, feat_dim).
    N, D = 16, 128
    centers = jax.random.normal(k1, (N, D), dtype=jnp.float32)
    x = jax.random.normal(k2, (N, D), dtype=jnp.float32)

    out = jax.block_until_ready(pedcc_model_apply(x, centers))
    ref = pedcc_reference(x, centers)
    assert out.shape == (N, D)
    assert jnp.allclose(out, ref, atol=1e-5, rtol=1e-5), "mismatch vs reference"

    # Non-aligned shape to exercise the padding path.
    N2, D2 = 10, 96
    centers2 = jax.random.normal(k3, (N2, D2), dtype=jnp.float32)
    x2 = jax.random.normal(k4, (N2, D2), dtype=jnp.float32)
    out2 = jax.block_until_ready(pedcc_model_apply(x2, centers2))
    ref2 = pedcc_reference(x2, centers2)
    assert out2.shape == (N2, D2)
    assert jnp.allclose(out2, ref2, atol=1e-5, rtol=1e-5), "mismatch vs reference (padded)"

    print("KERNEL_OK")
</pallas_src>

<mosaic_0001>
module attributes {stable_mosaic.version = 11 : i64} {
  func.func @_normalize_kernel(%arg0: i32, %arg1: memref<8x128xf32, #tpu.memory_space<vmem>>, %arg2: memref<8x128xf32, #tpu.memory_space<vmem>>) attributes {dimension_semantics = [#tpu.dimension_semantics<parallel>], iteration_bounds = array<i64: 2>, scalar_prefetch = 0 : i64, scratch_operands = 0 : i64, tpu.core_type = #tpu.core_type<tc>, window_params = [{transform_indices = @transform_0, window_bounds = array<i64: 8, 128>}, {transform_indices = @transform_1, window_bounds = array<i64: 8, 128>}]} {
    %c0 = arith.constant 0 : index
    %c0_0 = arith.constant 0 : index
    %0 = vector.load %arg1[%c0, %c0_0] : memref<8x128xf32, #tpu.memory_space<vmem>>, vector<8x128xf32>
    %1 = arith.mulf %0, %0 : vector<8x128xf32>
    %cst = arith.constant dense<0.000000e+00> : vector<8xf32>
    %2 = vector.multi_reduction <add>, %1, %cst [1] : vector<8x128xf32> to vector<8xf32>
    %3 = vector.shape_cast %2 : vector<8xf32> to vector<8x1xf32>
    %4 = math.rsqrt %3 : vector<8x1xf32>
    %5 = vector.broadcast %4 : vector<8x1xf32> to vector<8x128xf32>
    %6 = arith.mulf %0, %5 : vector<8x128xf32>
    %c0_1 = arith.constant 0 : index
    %c0_2 = arith.constant 0 : index
    %7 = vector.load %arg2[%c0_1, %c0_2] : memref<8x128xf32, #tpu.memory_space<vmem>>, vector<8x128xf32>
    tpu.vector_store %arg2[%c0_1, %c0_2], %6 {strides = array<i32>} : memref<8x128xf32, #tpu.memory_space<vmem>>, vector<8x128xf32>,
    return
  }
  func.func @transform_0(%arg0: i32) -> (i32, i32) {
    %c0_i32 = arith.constant 0 : i32
    %c0_i32_0 = arith.constant 0 : i32
    return %arg0, %c0_i32 : i32, i32
  }
  func.func @transform_1(%arg0: i32) -> (i32, i32) {
    %c0_i32 = arith.constant 0 : i32
    %c0_i32_0 = arith.constant 0 : i32
    return %arg0, %c0_i32 : i32, i32
  }
}

</mosaic_0001>

<llo_original>
// kernel: tpu_custom_call.1
$region0: #{tpu_custom_call.1}
  #allocation0 [shape = 'u32[]', space=smem, size = 0x4, offset = 0x4, fixed_abs, tag = 'smem constant byte address 0x4 - core index']
  #allocation1 [shape = 'u32[72,128]{1,0:T(1,128)}', space=vmem, size = 0x9000, scoped, tag = 'internal scratch']
  %s0 = inlined_call_operand.hbm [shape: f32[16,128], index: 0, kind: input, shape index: {}]
  %s1 = inlined_call_operand.hbm [shape: f32[16,128], index: 1, kind: output, shape index: {}]
  %s2 = sld [smem:[#allocation0]]
  $region41: #{tpu_custom_call.1} parent=0
    _
  %s4 = ssub.s32 1, %s2
  %s5 = scalar_select 0, %s4, %s2
  $region1: #{tpu_custom_call.1} parent=0
    #allocation2 [shape = 'u8[8192]{0}', space=vmem, size = 0x2000, scoped, tag = 'input window, operand 0']
    #allocation3 [shape = 's32[2]{0}', space=sflag, size = 0x8, scoped, tag = 'scoped memory for tpu_custom_call.1']
    #allocation4 [shape = 's32[2]{0}', space=sflag, size = 0x8, scoped, tag = 'scoped memory for tpu_custom_call.1']
    #allocation5 [shape = 'u8[8192]{0}', space=vmem, size = 0x2000, scoped, tag = 'output window, operand 0']
    %6 = vsyncpa [#allocation3], 0
    %s7 = scalar_lea.sflag [#allocation3], 1
    %8 = vsyncpa %s7, 0
    %9 = vsyncpa [#allocation4], 0
    %s10 = scalar_lea.sflag [#allocation4], 1
    %11 = vsyncpa %s10, 0
    loop: start=0, step=1, limit=4
    $region2: #{tpu_custom_call.1} parent=1 // loop_pre_header
      _
    $region3: #{tpu_custom_call.1} parent=1 // loop_header
      %s13 = sphi 0, %s17
      %p14 = scmp.ge.s32.totalorder %s13, 4
      %s23 = sphi 0, %s25
      %s26 = sphi 0, %s23
      %s27 = sphi 0, %s26
      %s43 = sphi 0, %s27
      %s49 = sphi 0, %s51
      %s52 = sphi 0, %s49
      %s53 = sphi 0, %s52
      %s69 = sphi 0, %s53
    $region4: #{tpu_custom_call.1} parent=1 // loop_header_branch
      %16 = sbr.rel (%p14) target = $region8
    $region5: #{tpu_custom_call.1} parent=1 // loop_body
      %s18 = ssub.s32 %s13, 1
      %s19 = ssub.s32 %s13, 2
      %s20 = sadd.s32 %s13, 1
      %s21 = ssub.s32 %s13, %s20
      %p22 = scmp.eq.s32.totalorder %s21, 0
      %s24 = sadd.s32 %s23, 1
      %s25 = scalar_select %p22, %s23, %s24
      %p28 = pneg %p22
      %p29 = scmp.eq.s32.totalorder %s13, 1
      %p30 = por %p28, %p29
      %p31 = scmp.ne.s32.totalorder %s23, %s26
      %p32 = scmp.eq.s32.totalorder %s13, 0
      %p33 = por %p31, %p32
      %p34 = scmp.ne.s32.totalorder %s23, %s26
      %p35 = scmp.eq.s32.totalorder %s18, 1
      %p36 = por %p34, %p35
      %p37 = scmp.ne.s32.totalorder %s26, %s27
      %p38 = scmp.eq.s32.totalorder %s18, 0
      %p39 = por %p37, %p38
      %p40 = scmp.ne.s32.totalorder %s26, %s27
      %p41 = scmp.eq.s32.totalorder %s19, 1
      %p42 = por %p40, %p41
      %p44 = scmp.ne.s32.totalorder %s27, %s43
      %p45 = scmp.eq.s32.totalorder %s19, 0
      %p46 = por %p44, %p45
      %s47 = ssub.s32 %s13, %s20
      %p48 = scmp.eq.s32.totalorder %s47, 0
      %s50 = sadd.s32 %s49, 1
      %s51 = scalar_select %p48, %s49, %s50
      %p54 = pneg %p48
      %p55 = scmp.eq.s32.totalorder %s13, 1
      %p56 = por %p54, %p55
      %p57 = scmp.ne.s32.totalorder %s49, %s52
      %p58 = scmp.eq.s32.totalorder %s13, 0
      %p59 = por %p57, %p58
      %p60 = scmp.ne.s32.totalorder %s49, %s52
      %p61 = scmp.eq.s32.totalorder %s18, 1
      %p62 = por %p60, %p61
      %p63 = scmp.ne.s32.totalorder %s52, %s53
      %p64 = scmp.eq.s32.totalorder %s18, 0
      %p65 = por %p63, %p64
      %p66 = scmp.ne.s32.totalorder %s52, %s53
      %p67 = scmp.eq.s32.totalorder %s19, 1
      %p68 = por %p66, %p67
      %p70 = scmp.ne.s32.totalorder %s53, %s69
      %p71 = scmp.eq.s32.totalorder %s19, 0
      %p72 = por %p70, %p71
      %p73 = scmp.le.s32.totalorder 1, %s13
      %p74 = scmp.lt.s32.totalorder %s13, 3
      %p75 = pnand %p73, %p74
      %p76 = pneg %p75
      // Predicated region
      $region9: #{tpu_custom_call.1} parent=5 // pred_check
        _
      $region10: #{tpu_custom_call.1} parent=5 // pred_check_branch
        %78 = sbr.rel (%p75) target = $region12
      $region11: #{tpu_custom_call.1} parent=5 // pred_region
        %s79 = ssub.s32 %s13, 1
      $region12: #{tpu_custom_call.1} parent=5 // pred_fallthru
        _
      %p80 = scmp.lt.s32.totalorder %s13, 2
      // Predicated region
      $region13: #{tpu_custom_call.1} parent=5 // pred_check
        %p81 = pneg %p80
      $region14: #{tpu_custom_call.1} parent=5 // pred_check_branch
        %83 = sbr.rel (%p81) target = $region16
      $region15: #{tpu_custom_call.1} parent=5 // pred_region
        // Predicated region
        $region17: #{tpu_custom_call.1} parent=15 // pred_check
          %p84 = pneg %p33
        $region18: #{tpu_custom_call.1} parent=15 // pred_check_branch
          %86 = sbr.rel (%p84) target = $region20
        $region19: #{tpu_custom_call.1} parent=15 // pred_region
          %s87 = sand.u32 %s23, 1
          %s88 = scalar_lea.sflag [#allocation3], %s87
          %s89 = sand.u32 %s23, 1
          %s90 = smul.addr %s89, 8
          %s91 = scalar_lea.vmem [#allocation2], %s90
          %93 = vsyncadd %s88, 0
          %s94 = smul.addr %s13, 8
          %s95 = scalar_lea.hbm %s0, %s94
          %s97 = sshll.u32 %s95, 4
          %s98 = int_to_ptr.hbm [resolvable:$true] %s97
          %s99 = sshll.u32 %s91, 4
          %s100 = int_to_ptr.vmem [resolvable:$true] %s99
          %102 = dma.hbm_to_vmem [thread:$0]  %s98, 128, %s100, %s88
        $region20: #{tpu_custom_call.1} parent=15 // pred_fallthru
          _
      $region16: #{tpu_custom_call.1} parent=5 // pred_fallthru
        _
      %p103 = scmp.le.s32.totalorder 1, %s13
      %p104 = scmp.lt.s32.totalorder %s13, 3
      %p105 = pnand %p103, %p104
      %p106 = pneg %p105
      // Predicated region
      $region21: #{tpu_custom_call.1} parent=5 // pred_check
        _
      $region22: #{tpu_custom_call.1} parent=5 // pred_check_branch
        %108 = sbr.rel (%p105) target = $region24
      $region23: #{tpu_custom_call.1} parent=5 // pred_region
        %s109 = ssub.s32 %s13, 1
        %s110 = sand.u32 %s26, 1
        %s111 = scalar_lea.sflag [#allocation3], %s110
        %s112 = sand.u32 %s26, 1
        %s113 = smul.addr %s112, 8
        %s114 = scalar_lea.vmem [#allocation2], %s113
        // Predicated region
        $region25: #{tpu_custom_call.1} parent=23 // pred_check
          %p115 = pneg %p39
        $region26: #{tpu_custom_call.1} parent=23 // pred_check_branch
          %117 = sbr.rel (%p115) target = $region28
        $region27: #{tpu_custom_call.1} parent=23 // pred_region
          %119 = dma.done %s111, 128
        $region28: #{tpu_custom_call.1} parent=23 // pred_fallthru
          _
        %s120 = sand.u32 %s26, 1
        %s121 = scalar_lea.sflag [#allocation3], %s120
        %s122 = sand.u32 %s26, 1
        %s123 = smul.addr %s122, 8
        %s124 = scalar_lea.vmem [#allocation2], %s123
        %p125 = pneg %p39
        %p126 = pneg %p36
        %p127 = pneg %p65
        %p128 = pneg %p62
        %s129 = sand.u32 %s52, 1
        %s130 = scalar_lea.sflag [#allocation4], %s129
        %s131 = sand.u32 %s52, 1
        %s132 = smul.addr %s131, 8
        %s133 = scalar_lea.vmem [#allocation5], %s132
        %v134 = vld [vmem:[%s114] sm:$0xff]
        %v135 = vmul.f32 %v134, %v134
        %136 = vadd.xlane.f32.xlu0 %v135
        %v137 = vpop.xlane.xlu0 %136
        %v138 = vrsqrt.pop %v137
        %v139 = vmul.f32 %v138, %v137
        %v140 = vmul.f32 %v139, %v138
        %v141 = vmul.f32 0.5, %v140
        %v142 = vsub.f32 1.5, %v141
        %v143 = vmul.f32 %v138, %v142
        %vm144 = vweird.f32 %v137
        %vm145 = vweird.f32 %v138
        %vm146 = vmor %vm144, %vm145
        %v147 = vsel %vm146, %v138, %v143
        %v148 = vmul.f32 %v134, %v147
        %149 = vst [vmem:[%s133] sm:$0xff] %v148
        %s150 = sand.u32 %s52, 1
        %s151 = scalar_lea.sflag [#allocation4], %s150
        %s152 = sand.u32 %s52, 1
        %s153 = smul.addr %s152, 8
        %s154 = scalar_lea.vmem [#allocation5], %s153
        // Predicated region
        $region29: #{tpu_custom_call.1} parent=23 // pred_check
          %p155 = pneg %p62
        $region30: #{tpu_custom_call.1} parent=23 // pred_check_branch
          %157 = sbr.rel (%p155) target = $region32
        $region31: #{tpu_custom_call.1} parent=23 // pred_region
          %159 = vsyncadd %s151, 0
          %s160 = smul.addr %s18, 8
          %s161 = scalar_lea.hbm %s1, %s160
          %s163 = sshll.u32 %s154, 4
          %s164 = int_to_ptr.vmem [resolvable:$true] %s163
          %s165 = sshll.u32 %s161, 4
          %s166 = int_to_ptr.hbm [resolvable:$true] %s165
          %168 = dma.vmem_to_hbm [thread:$0]  %s164, 128, %s166, %s151
        $region32: #{tpu_custom_call.1} parent=23 // pred_fallthru
          _
      $region24: #{tpu_custom_call.1} parent=5 // pred_fallthru
        _
      %p169 = scmp.le.s32.totalorder 2, %s13
      // Predicated region
      $region33: #{tpu_custom_call.1} parent=5 // pred_check
        %p170 = pneg %p169
      $region34: #{tpu_custom_call.1} parent=5 // pred_check_branch
        %172 = sbr.rel (%p170) target = $region36
      $region35: #{tpu_custom_call.1} parent=5 // pred_region
        %s173 = ssub.s32 %s13, 2
        // Predicated region
        $region37: #{tpu_custom_call.1} parent=35 // pred_check
          %p174 = pneg %p68
        $region38: #{tpu_custom_call.1} parent=35 // pred_check_branch
          %176 = sbr.rel (%p174) target = $region40
        $region39: #{tpu_custom_call.1} parent=35 // pred_region
          %s177 = sand.u32 %s53, 1
          %s178 = scalar_lea.sflag [#allocation4], %s177
          %s179 = sand.u32 %s53, 1
          %s180 = smul.addr %s179, 8
          %s181 = scalar_lea.vmem [#allocation5], %s180
          %183 = dma.done %s178, 128
        $region40: #{tpu_custom_call.1} parent=35 // pred_fallthru
          _
      $region36: #{tpu_custom_call.1} parent=5 // pred_fallthru
        _
    $region6: #{tpu_custom_call.1} parent=1 // loop_footer
      %s17 = sadd.s32 1, %s13
    $region7: #{tpu_custom_call.1} parent=1 // loop_footer_branch
      %12 = sbr.rel target = $region3
    $region8: #{tpu_custom_call.1} parent=1 // loop_exit
      _
    %184 = vsyncpa [#allocation3], 1
    %s185 = scalar_lea.sflag [#allocation3], 1
    %186 = vsyncpa %s185, 1
    %187 = vsyncpa [#allocation4], 1
    %s188 = scalar_lea.sflag [#allocation4], 1
    %189 = vsyncpa %s188, 1

</llo_original>
